<compile_context>
chip_gen: v6e
topology: v6e:2x2x1
jax: 0.10.0
libtpu: 0.0.40
codegen_flags: <defaults>
</compile_context>

<pallas_src>
import functools

import jax
import jax.numpy as jnp
from jax.experimental import pallas as pl
from jax.experimental.pallas import tpu as pltpu

_LANE = 128     # lane width (last dim)
_SUBLANE = 8    # sublane width (second-to-last dim)


def _round_up(n, m):
    return ((n + m - 1) // m) * m


def _mlp_kernel(num_layers, compute_dtype, *refs):
    """Fused MLP forward over one batch tile.

    refs = (x_ref, w0_ref, b0_ref, ..., w{L-1}_ref, b{L-1}_ref, out_ref)
    Weights are (in, out); biases are (1, out).  Hidden dims are zero-padded
    to multiples of 128; x/out keep their real feature widths.
    """
    x_ref = refs[0]
    out_ref = refs[-1]
    params = refs[1:-1]

    h = x_ref[...]
    if h.dtype != jnp.float32:
        h = h.astype(jnp.float32)

    for i in range(num_layers):
        w = params[2 * i][...]
        b = params[2 * i + 1][...]
        lhs = h if h.dtype == compute_dtype else h.astype(compute_dtype)
        rhs = w if w.dtype == compute_dtype else w.astype(compute_dtype)
        h = jnp.dot(lhs, rhs, preferred_element_type=jnp.float32)
        h = h + (b if b.dtype == jnp.float32 else b.astype(jnp.float32))
        if i < num_layers - 1:           # hidden layers: ReLU
            h = jnp.maximum(h, 0.0)

    out_ref[...] = h.astype(out_ref.dtype)


def _vmem_capacity_bytes():
    """Generation-aware VMEM capacity (128 MiB v5e/v6e, 64 MiB v7x)."""
    try:
        info = pltpu.get_tpu_info()
        cap = getattr(info, "vmem_capacity_bytes", None)
        if cap:
            return int(cap)
    except Exception:
        pass
    return 64 << 20   # conservative fallback: v7x per-TensorCore VMEM


def fully_connected_forward(x, weights, biases, *, use_bf16=False,
                            max_tile_m=2048):
    """Forward of DSTGCN fully_connected_layer.

    x:        (batch, input_size)
    weights:  list of (in_i, out_i) arrays (already transposed vs torch)
    biases:   list of (out_i,) arrays
    returns:  (batch, output_size)
    """
    num_layers = len(weights)
    batch, input_size = x.shape
    output_size = weights[-1].shape[1]
    hidden = [w.shape[1] for w in weights[:-1]]

    param_dtype = jnp.bfloat16 if use_bf16 else jnp.float32
    compute_dtype = jnp.bfloat16 if use_bf16 else jnp.float32

    # ---- pad only the internal (hidden) dims of weights/biases to 128 ----
    # First layer's in-dim stays = input_size (to match the unpadded x block);
    # last layer's out-dim stays = output_size (to match the unpadded out block).
    in_dims = [input_size] + hidden
    out_dims = hidden + [output_size]
    w_pads, b_pads = [], []
    for i in range(num_layers):
        w = weights[i].astype(param_dtype)
        b = biases[i].astype(param_dtype)
        in_p = in_dims[i] if i == 0 else _round_up(in_dims[i], _LANE)
        out_p = out_dims[i] if i == num_layers - 1 else _round_up(out_dims[i], _LANE)
        if w.shape == (in_p, out_p):
            w_p = w
        else:
            w_p = jnp.zeros((in_p, out_p), param_dtype)
            w_p = w_p.at[: w.shape[0], : w.shape[1]].set(w)
        if b.shape[0] == out_p:
            b_p = b.reshape(1, out_p)
        else:
            b_p = jnp.zeros((1, out_p), param_dtype).at[0, : b.shape[0]].set(b)
        w_pads.append(w_p)
        b_pads.append(b_p)

    # ---- VMEM budget & batch-tile sizing ----
    cap = _vmem_capacity_bytes()
    budget = (3 * cap) // 4                 # ~96 MiB on v5e/v6e, ~48 MiB on v7x

    p_item = jnp.dtype(param_dtype).itemsize
    # Pallas double-buffers inputs by default, even constant-index resident ones.
    params_vmem = 2 * p_item * (sum(w.size for w in w_pads) +
                                sum(b.size for b in b_pads))

    max_width = max([input_size] + [w.shape[1] for w in w_pads])
    # per-row bytes: double-buffered x & out tiles + ~3 live f32 activation slabs
    per_row = 4 * (2 * input_size + 2 * output_size + 3 * max_width)

    avail = budget - params_vmem
    if avail < per_row * 64:
        # Resident params dominate VMEM; keep a modest tile rather than degrade
        # to useless 8-row tiles.
        # TODO(synk): stream weight chunks (second grid axis / emit_pipeline)
        # when padded params alone exceed the VMEM budget (very large hidden_size).
        avail = per_row * 256

    tile_cap = max(_SUBLANE,
                   min((avail // per_row) // _SUBLANE * _SUBLANE, max_tile_m))

    m8 = _round_up(batch, _SUBLANE)
    tile_m = min(tile_cap, m8)
    grid_m = pl.cdiv(m8, tile_m)
    if grid_m == 1 and m8 >= 2 * _SUBLANE:
        grid_m = 2                          # give both v7x TensorCores work
    # Rebalance so the last (ragged) tile is nearly full — no batch padding in HBM.
    tile_m = _round_up(pl.cdiv(m8, grid_m), _SUBLANE)
    grid_m = pl.cdiv(batch, tile_m)

    est_vmem = params_vmem + per_row * tile_m
    vmem_limit = int(min(max(est_vmem + est_vmem // 2 + (4 << 20), 16 << 20),
                         (9 * cap) // 10))

    # ---- BlockSpecs: x/out tiled over the batch grid (real feature widths);
    #      params are full-array blocks with constant index_map (VMEM-resident).
    in_specs = [pl.BlockSpec((tile_m, input_size), lambda m: (m, 0))]
    args = [x]
    for w_p, b_p in zip(w_pads, b_pads):
        in_specs.append(pl.BlockSpec(w_p.shape, lambda m: (0, 0)))
        in_specs.append(pl.BlockSpec(b_p.shape, lambda m: (0, 0)))
        args.append(w_p)
        args.append(b_p)
    out_spec = pl.BlockSpec((tile_m, output_size), lambda m: (m, 0))

    flops = 2 * batch * sum(ki * ni for ki, ni in zip(in_dims, out_dims))
    bytes_accessed = (x.size * x.dtype.itemsize
                      + p_item * (sum(w.size for w in w_pads) +
                                  sum(b.size for b in b_pads))
                      + batch * output_size * x.dtype.itemsize)
    cost = pl.CostEstimate(flops=int(flops), transcendentals=0,
                           bytes_accessed=int(bytes_accessed))

    kernel = functools.partial(_mlp_kernel, num_layers, compute_dtype)

    out = pl.pallas_call(
        kernel,
        out_shape=jax.ShapeDtypeStruct((batch, output_size), x.dtype),
        grid=(grid_m,),
        in_specs=in_specs,
        out_specs=out_spec,
        compiler_params=pltpu.CompilerParams(
            dimension_semantics=("parallel",),
            vmem_limit_bytes=vmem_limit,
        ),
        cost_estimate=cost,
    )(*args)

    return out


def init_params(key, input_size, hidden_size, output_size):
    """PyTorch-style uniform(+/- 1/sqrt(fan_in)) init; weights are (in, out)."""
    sizes_in = [input_size] + list(hidden_size)
    sizes_out = list(hidden_size) + [output_size]
    weights, biases = [], []
    for fan_in, fan_out in zip(sizes_in, sizes_out):
        key, kw, kb = jax.random.split(key, 3)
        bound = 1.0 / (fan_in ** 0.5)
        w = jax.random.uniform(kw, (fan_in, fan_out), jnp.float32, -bound, bound)
        b = jax.random.uniform(kb, (fan_out,), jnp.float32, -bound, bound)
        weights.append(w)
        biases.append(b)
    return weights, biases


def reference_forward(x, weights, biases):
    h = x
    for w, b in zip(weights[:-1], biases[:-1]):
        h = jnp.maximum(h @ w + b, 0.0)
    return h @ weights[-1] + biases[-1]


if __name__ == "__main__":
    # Small shapes consistent with the module; batch chosen so the batch grid
    # has >1 (balanced, ragged-tail) step and the hidden-dim padding path runs.
    batch = 300
    input_size = 16
    hidden_size = [32, 64]
    output_size = 8

    key = jax.random.PRNGKey(0)
    key, kx = jax.random.split(key)
    x = jax.random.normal(kx, (batch, input_size), jnp.float32)

    weights, biases = init_params(key, input_size, hidden_size, output_size)

    out = fully_connected_forward(x, weights, biases)
    out = jax.block_until_ready(out)

    ref = reference_forward(x, weights, biases)
    assert out.shape == (batch, output_size)
    assert jnp.allclose(out, ref, atol=1e-5, rtol=1e-5), "mismatch vs reference"

    print("KERNEL_OK")
</pallas_src>

<mosaic_0001>
module attributes {stable_mosaic.version = 11 : i64} {
  func.func @_mlp_kernel(%arg0: i32, %arg1: memref<152x16xf32, #tpu.memory_space<vmem>>, %arg2: memref<16x128xf32, #tpu.memory_space<vmem>>, %arg3: memref<1x128xf32, #tpu.memory_space<vmem>>, %arg4: memref<128x128xf32, #tpu.memory_space<vmem>>, %arg5: memref<1x128xf32, #tpu.memory_space<vmem>>, %arg6: memref<128x8xf32, #tpu.memory_space<vmem>>, %arg7: memref<1x8xf32, #tpu.memory_space<vmem>>, %arg8: memref<152x8xf32, #tpu.memory_space<vmem>>) attributes {dimension_semantics = [#tpu.dimension_semantics<parallel>], iteration_bounds = array<i64: 2>, scalar_prefetch = 0 : i64, scratch_operands = 0 : i64, tpu.core_type = #tpu.core_type<tc>, window_params = [{transform_indices = @transform_0, window_bounds = array<i64: 152, 16>}, {pipeline_mode = #tpu.pipeline_mode<synchronous>, transform_indices = @transform_1, window_bounds = array<i64: 16, 128>}, {pipeline_mode = #tpu.pipeline_mode<synchronous>, transform_indices = @transform_2, window_bounds = array<i64: 1, 128>}, {pipeline_mode = #tpu.pipeline_mode<synchronous>, transform_indices = @transform_3, window_bounds = array<i64: 128, 128>}, {pipeline_mode = #tpu.pipeline_mode<synchronous>, transform_indices = @transform_4, window_bounds = array<i64: 1, 128>}, {pipeline_mode = #tpu.pipeline_mode<synchronous>, transform_indices = @transform_5, window_bounds = array<i64: 128, 8>}, {pipeline_mode = #tpu.pipeline_mode<synchronous>, transform_indices = @transform_6, window_bounds = array<i64: 1, 8>}, {transform_indices = @transform_7, window_bounds = array<i64: 152, 8>}]} {
    %c0 = arith.constant 0 : index
    %c0_0 = arith.constant 0 : index
    %0 = vector.load %arg1[%c0, %c0_0] : memref<152x16xf32, #tpu.memory_space<vmem>>, vector<152x16xf32>
    %c0_1 = arith.constant 0 : index
    %c0_2 = arith.constant 0 : index
    %1 = vector.load %arg2[%c0_1, %c0_2] : memref<16x128xf32, #tpu.memory_space<vmem>>, vector<16x128xf32>
    %c0_3 = arith.constant 0 : index
    %c0_4 = arith.constant 0 : index
    %2 = vector.load %arg3[%c0_3, %c0_4] : memref<1x128xf32, #tpu.memory_space<vmem>>, vector<1x128xf32>
    %cst = arith.constant dense<0.000000e+00> : vector<152x128xf32>
    %3 = tpu.matmul %0, %1, %cst {dimension_numbers = #tpu.dot_dimension_numbers<[1], [0], [0], [1], [0, 0, 1, 1], [], []>} : vector<152x16xf32>, vector<16x128xf32>, vector<152x128xf32> -> vector<152x128xf32>
    %4 = vector.broadcast %2 : vector<1x128xf32> to vector<152x128xf32>
    %5 = arith.addf %3, %4 : vector<152x128xf32>
    %cst_5 = arith.constant 0.000000e+00 : f32
    %6 = vector.broadcast %cst_5 : f32 to vector<152x128xf32>
    %7 = arith.maximumf %5, %6 : vector<152x128xf32>
    %c0_6 = arith.constant 0 : index
    %c0_7 = arith.constant 0 : index
    %8 = vector.load %arg4[%c0_6, %c0_7] : memref<128x128xf32, #tpu.memory_space<vmem>>, vector<128x128xf32>
    %c0_8 = arith.constant 0 : index
    %c0_9 = arith.constant 0 : index
    %9 = vector.load %arg5[%c0_8, %c0_9] : memref<1x128xf32, #tpu.memory_space<vmem>>, vector<1x128xf32>
    %cst_10 = arith.constant dense<0.000000e+00> : vector<152x128xf32>
    %10 = tpu.matmul %7, %8, %cst_10 {dimension_numbers = #tpu.dot_dimension_numbers<[1], [0], [0], [1], [0, 0, 1, 1], [], []>} : vector<152x128xf32>, vector<128x128xf32>, vector<152x128xf32> -> vector<152x128xf32>
    %11 = vector.broadcast %9 : vector<1x128xf32> to vector<152x128xf32>
    %12 = arith.addf %10, %11 : vector<152x128xf32>
    %cst_11 = arith.constant 0.000000e+00 : f32
    %13 = vector.broadcast %cst_11 : f32 to vector<152x128xf32>
    %14 = arith.maximumf %12, %13 : vector<152x128xf32>
    %c0_12 = arith.constant 0 : index
    %c0_13 = arith.constant 0 : index
    %15 = vector.load %arg6[%c0_12, %c0_13] : memref<128x8xf32, #tpu.memory_space<vmem>>, vector<128x8xf32>
    %c0_14 = arith.constant 0 : index
    %c0_15 = arith.constant 0 : index
    %16 = vector.load %arg7[%c0_14, %c0_15] : memref<1x8xf32, #tpu.memory_space<vmem>>, vector<1x8xf32>
    %cst_16 = arith.constant dense<0.000000e+00> : vector<152x8xf32>
    %17 = tpu.matmul %14, %15, %cst_16 {dimension_numbers = #tpu.dot_dimension_numbers<[1], [0], [0], [1], [0, 0, 1, 1], [], []>} : vector<152x128xf32>, vector<128x8xf32>, vector<152x8xf32> -> vector<152x8xf32>
    %18 = vector.broadcast %16 : vector<1x8xf32> to vector<152x8xf32>
    %19 = arith.addf %17, %18 : vector<152x8xf32>
    %c0_17 = arith.constant 0 : index
    %c0_18 = arith.constant 0 : index
    %20 = vector.load %arg8[%c0_17, %c0_18] : memref<152x8xf32, #tpu.memory_space<vmem>>, vector<152x8xf32>
    tpu.vector_store %arg8[%c0_17, %c0_18], %19 {strides = array<i32>} : memref<152x8xf32, #tpu.memory_space<vmem>>, vector<152x8xf32>,
    return
  }
  func.func @transform_0(%arg0: i32) -> (i32, i32) {
    %c0_i32 = arith.constant 0 : i32
    %c0_i32_0 = arith.constant 0 : i32
    return %arg0, %c0_i32 : i32, i32
  }
  func.func @transform_1(%arg0: i32) -> (i32, i32) {
    %c0_i32 = arith.constant 0 : i32
    %c0_i32_0 = arith.constant 0 : i32
    %c0_i32_1 = arith.constant 0 : i32
    return %c0_i32, %c0_i32_0 : i32, i32
  }
  func.func @transform_2(%arg0: i32) -> (i32, i32) {
    %c0_i32 = arith.constant 0 : i32
    %c0_i32_0 = arith.constant 0 : i32
    %c0_i32_1 = arith.constant 0 : i32
    return %c0_i32, %c0_i32_0 : i32, i32
  }
  func.func @transform_3(%arg0: i32) -> (i32, i32) {
    %c0_i32 = arith.constant 0 : i32
    %c0_i32_0 = arith.constant 0 : i32
    %c0_i32_1 = arith.constant 0 : i32
    return %c0_i32, %c0_i32_0 : i32, i32
  }
  func.func @transform_4(%arg0: i32) -> (i32, i32) {
    %c0_i32 = arith.constant 0 : i32
    %c0_i32_0 = arith.constant 0 : i32
    %c0_i32_1 = arith.constant 0 : i32
    return %c0_i32, %c0_i32_0 : i32, i32
  }
  func.func @transform_5(%arg0: i32) -> (i32, i32) {
    %c0_i32 = arith.constant 0 : i32
    %c0_i32_0 = arith.constant 0 : i32
    %c0_i32_1 = arith.constant 0 : i32
    return %c0_i32, %c0_i32_0 : i32, i32
  }
  func.func @transform_6(%arg0: i32) -> (i32, i32) {
    %c0_i32 = arith.constant 0 : i32
    %c0_i32_0 = arith.constant 0 : i32
    %c0_i32_1 = arith.constant 0 : i32
    return %c0_i32, %c0_i32_0 : i32, i32
  }
  func.func @transform_7(%arg0: i32) -> (i32, i32) {
    %c0_i32 = arith.constant 0 : i32
    %c0_i32_0 = arith.constant 0 : i32
    return %arg0, %c0_i32 : i32, i32
  }
}

</mosaic_0001>

<llo_original>
// kernel: tpu_custom_call.1
$region0: #{tpu_custom_call.1}
  #allocation0 [shape = 'u32[]', space=smem, size = 0x4, offset = 0x4, fixed_abs, tag = 'smem constant byte address 0x4 - core index']
  #allocation1 [shape = 'u32[144,128]{1,0:T(1,128)}', space=vmem, size = 0x12000, scoped, tag = 'internal scratch']
  %s0 = inlined_call_operand.vmem [shape: f32[300,16], index: 0, kind: input, shape index: {}]
  %s1 = inlined_call_operand.vmem [shape: f32[16,128], index: 1, kind: input, shape index: {}]
  %s2 = inlined_call_operand.vmem [shape: f32[1,128], index: 2, kind: input, shape index: {}]
  %s3 = inlined_call_operand.vmem [shape: f32[128,128], index: 3, kind: input, shape index: {}]
  %s4 = inlined_call_operand.vmem [shape: f32[1,128], index: 4, kind: input, shape index: {}]
  %s5 = inlined_call_operand.vmem [shape: f32[128,8], index: 5, kind: input, shape index: {}]
  %s6 = inlined_call_operand.vmem [shape: f32[1,8], index: 6, kind: input, shape index: {}]
  %s7 = inlined_call_operand.vmem [shape: f32[300,8], index: 7, kind: output, shape index: {}]
  %s8 = sld [smem:[#allocation0]]
  $region61: #{tpu_custom_call.1} parent=0
    _
  %s10 = ssub.s32 1, %s8
  %s11 = scalar_select 0, %s10, %s8
  loop: start=0, step=1, limit=4
  $region2: #{tpu_custom_call.1} parent=0 // loop_pre_header
    _
  $region3: #{tpu_custom_call.1} parent=0 // loop_header
    %s13 = sphi 0, %s17
    %p14 = scmp.ge.s32.totalorder %s13, 4
    %s23 = sphi 0, %s25
    %s26 = sphi 0, %s23
    %s27 = sphi 0, %s26
    %s43 = sphi 0, %s27
    %s47 = sphi 0, %s47
    %s49 = sphi 0, %s47
    %s50 = sphi 0, %s49
    %s64 = sphi 0, %s50
    %s68 = sphi 0, %s68
    %s70 = sphi 0, %s68
    %s71 = sphi 0, %s70
    %s85 = sphi 0, %s71
    %s89 = sphi 0, %s89
    %s91 = sphi 0, %s89
    %s92 = sphi 0, %s91
    %s106 = sphi 0, %s92
    %s110 = sphi 0, %s110
    %s112 = sphi 0, %s110
    %s113 = sphi 0, %s112
    %s127 = sphi 0, %s113
    %s131 = sphi 0, %s131
    %s133 = sphi 0, %s131
    %s134 = sphi 0, %s133
    %s148 = sphi 0, %s134
    %s152 = sphi 0, %s152
    %s154 = sphi 0, %s152
    %s155 = sphi 0, %s154
    %s169 = sphi 0, %s155
    %s175 = sphi 0, %s177
    %s178 = sphi 0, %s175
    %s179 = sphi 0, %s178
    %s195 = sphi 0, %s179
  $region4: #{tpu_custom_call.1} parent=0 // loop_header_branch
    %16 = sbr.rel (%p14) target = $region8
  $region5: #{tpu_custom_call.1} parent=0 // loop_body
    %s18 = ssub.s32 %s13, 1
    %s19 = ssub.s32 %s13, 2
    %s20 = sadd.s32 %s13, 1
    %s21 = ssub.s32 %s13, %s20
    %p22 = scmp.eq.s32.totalorder %s21, 0
    %s24 = sadd.s32 %s23, 1
    %s25 = scalar_select %p22, %s23, %s24
    %p28 = pneg %p22
    %p29 = scmp.eq.s32.totalorder %s13, 1
    %p30 = por %p28, %p29
    %p31 = scmp.ne.s32.totalorder %s23, %s26
    %p32 = scmp.eq.s32.totalorder %s13, 0
    %p33 = por %p31, %p32
    %p34 = scmp.ne.s32.totalorder %s23, %s26
    %p35 = scmp.eq.s32.totalorder %s18, 1
    %p36 = por %p34, %p35
    %p37 = scmp.ne.s32.totalorder %s26, %s27
    %p38 = scmp.eq.s32.totalorder %s18, 0
    %p39 = por %p37, %p38
    %p40 = scmp.ne.s32.totalorder %s26, %s27
    %p41 = scmp.eq.s32.totalorder %s19, 1
    %p42 = por %p40, %p41
    %p44 = scmp.ne.s32.totalorder %s27, %s43
    %p45 = scmp.eq.s32.totalorder %s19, 0
    %p46 = por %p44, %p45
    %s48 = sadd.s32 %s47, 1
    %p51 = scmp.eq.s32.totalorder %s13, 1
    %p52 = scmp.ne.s32.totalorder %s47, %s49
    %p53 = scmp.eq.s32.totalorder %s13, 0
    %p54 = por %p52, %p53
    %p55 = scmp.ne.s32.totalorder %s47, %s49
    %p56 = scmp.eq.s32.totalorder %s18, 1
    %p57 = por %p55, %p56
    %p58 = scmp.ne.s32.totalorder %s49, %s50
    %p59 = scmp.eq.s32.totalorder %s18, 0
    %p60 = por %p58, %p59
    %p61 = scmp.ne.s32.totalorder %s49, %s50
    %p62 = scmp.eq.s32.totalorder %s19, 1
    %p63 = por %p61, %p62
    %p65 = scmp.ne.s32.totalorder %s50, %s64
    %p66 = scmp.eq.s32.totalorder %s19, 0
    %p67 = por %p65, %p66
    %s69 = sadd.s32 %s68, 1
    %p72 = scmp.eq.s32.totalorder %s13, 1
    %p73 = scmp.ne.s32.totalorder %s68, %s70
    %p74 = scmp.eq.s32.totalorder %s13, 0
    %p75 = por %p73, %p74
    %p76 = scmp.ne.s32.totalorder %s68, %s70
    %p77 = scmp.eq.s32.totalorder %s18, 1
    %p78 = por %p76, %p77
    %p79 = scmp.ne.s32.totalorder %s70, %s71
    %p80 = scmp.eq.s32.totalorder %s18, 0
    %p81 = por %p79, %p80
    %p82 = scmp.ne.s32.totalorder %s70, %s71
    %p83 = scmp.eq.s32.totalorder %s19, 1
    %p84 = por %p82, %p83
    %p86 = scmp.ne.s32.totalorder %s71, %s85
    %p87 = scmp.eq.s32.totalorder %s19, 0
    %p88 = por %p86, %p87
    %s90 = sadd.s32 %s89, 1
    %p93 = scmp.eq.s32.totalorder %s13, 1
    %p94 = scmp.ne.s32.totalorder %s89, %s91
    %p95 = scmp.eq.s32.totalorder %s13, 0
    %p96 = por %p94, %p95
    %p97 = scmp.ne.s32.totalorder %s89, %s91
    %p98 = scmp.eq.s32.totalorder %s18, 1
    %p99 = por %p97, %p98
    %p100 = scmp.ne.s32.totalorder %s91, %s92
    %p101 = scmp.eq.s32.totalorder %s18, 0
    %p102 = por %p100, %p101
    %p103 = scmp.ne.s32.totalorder %s91, %s92
    %p104 = scmp.eq.s32.totalorder %s19, 1
    %p105 = por %p103, %p104
    %p107 = scmp.ne.s32.totalorder %s92, %s106
    %p108 = scmp.eq.s32.totalorder %s19, 0
    %p109 = por %p107, %p108
    %s111 = sadd.s32 %s110, 1
    %p114 = scmp.eq.s32.totalorder %s13, 1
    %p115 = scmp.ne.s32.totalorder %s110, %s112
    %p116 = scmp.eq.s32.totalorder %s13, 0
    %p117 = por %p115, %p116
    %p118 = scmp.ne.s32.totalorder %s110, %s112
    %p119 = scmp.eq.s32.totalorder %s18, 1
    %p120 = por %p118, %p119
    %p121 = scmp.ne.s32.totalorder %s112, %s113
    %p122 = scmp.eq.s32.totalorder %s18, 0
    %p123 = por %p121, %p122
    %p124 = scmp.ne.s32.totalorder %s112, %s113
    %p125 = scmp.eq.s32.totalorder %s19, 1
    %p126 = por %p124, %p125
    %p128 = scmp.ne.s32.totalorder %s113, %s127
    %p129 = scmp.eq.s32.totalorder %s19, 0
    %p130 = por %p128, %p129
    %s132 = sadd.s32 %s131, 1
    %p135 = scmp.eq.s32.totalorder %s13, 1
    %p136 = scmp.ne.s32.totalorder %s131, %s133
    %p137 = scmp.eq.s32.totalorder %s13, 0
    %p138 = por %p136, %p137
    %p139 = scmp.ne.s32.totalorder %s131, %s133
    %p140 = scmp.eq.s32.totalorder %s18, 1
    %p141 = por %p139, %p140
    %p142 = scmp.ne.s32.totalorder %s133, %s134
    %p143 = scmp.eq.s32.totalorder %s18, 0
    %p144 = por %p142, %p143
    %p145 = scmp.ne.s32.totalorder %s133, %s134
    %p146 = scmp.eq.s32.totalorder %s19, 1
    %p147 = por %p145, %p146
    %p149 = scmp.ne.s32.totalorder %s134, %s148
    %p150 = scmp.eq.s32.totalorder %s19, 0
    %p151 = por %p149, %p150
    %s153 = sadd.s32 %s152, 1
    %p156 = scmp.eq.s32.totalorder %s13, 1
    %p157 = scmp.ne.s32.totalorder %s152, %s154
    %p158 = scmp.eq.s32.totalorder %s13, 0
    %p159 = por %p157, %p158
    %p160 = scmp.ne.s32.totalorder %s152, %s154
    %p161 = scmp.eq.s32.totalorder %s18, 1
    %p162 = por %p160, %p161
    %p163 = scmp.ne.s32.totalorder %s154, %s155
    %p164 = scmp.eq.s32.totalorder %s18, 0
    %p165 = por %p163, %p164
    %p166 = scmp.ne.s32.totalorder %s154, %s155
    %p167 = scmp.eq.s32.totalorder %s19, 1
    %p168 = por %p166, %p167
    %p170 = scmp.ne.s32.totalorder %s155, %s169
    %p171 = scmp.eq.s32.totalorder %s19, 0
    %p172 = por %p170, %p171
    %s173 = ssub.s32 %s13, %s20
    %p174 = scmp.eq.s32.totalorder %s173, 0
    %s176 = sadd.s32 %s175, 1
    %s177 = scalar_select %p174, %s175, %s176
    %p180 = pneg %p174
    %p181 = scmp.eq.s32.totalorder %s13, 1
    %p182 = por %p180, %p181
    %p183 = scmp.ne.s32.totalorder %s175, %s178
    %p184 = scmp.eq.s32.totalorder %s13, 0
    %p185 = por %p183, %p184
    %p186 = scmp.ne.s32.totalorder %s175, %s178
    %p187 = scmp.eq.s32.totalorder %s18, 1
    %p188 = por %p186, %p187
    %p189 = scmp.ne.s32.totalorder %s178, %s179
    %p190 = scmp.eq.s32.totalorder %s18, 0
    %p191 = por %p189, %p190
    %p192 = scmp.ne.s32.totalorder %s178, %s179
    %p193 = scmp.eq.s32.totalorder %s19, 1
    %p194 = por %p192, %p193
    %p196 = scmp.ne.s32.totalorder %s179, %s195
    %p197 = scmp.eq.s32.totalorder %s19, 0
    %p198 = por %p196, %p197
    %p199 = scmp.le.s32.totalorder 1, %s13
    %p200 = scmp.lt.s32.totalorder %s13, 3
    %p201 = pnand %p199, %p200
    %p202 = pneg %p201
    // Predicated region
    $region9: #{tpu_custom_call.1} parent=5 // pred_check
      _
    $region10: #{tpu_custom_call.1} parent=5 // pred_check_branch
      %204 = sbr.rel (%p201) target = $region12
    $region11: #{tpu_custom_call.1} parent=5 // pred_region
      %s205 = ssub.s32 %s13, 1
      // Predicated region
      $region13: #{tpu_custom_call.1} parent=11 // pred_check
        %p206 = pneg %p60
      $region14: #{tpu_custom_call.1} parent=11 // pred_check_branch
        %208 = sbr.rel (%p206) target = $region16
      $region15: #{tpu_custom_call.1} parent=11 // pred_region
        _
      $region16: #{tpu_custom_call.1} parent=11 // pred_fallthru
        _
      // Predicated region
      $region17: #{tpu_custom_call.1} parent=11 // pred_check
        %p209 = pneg %p81
      $region18: #{tpu_custom_call.1} parent=11 // pred_check_branch
        %211 = sbr.rel (%p209) target = $region20
      $region19: #{tpu_custom_call.1} parent=11 // pred_region
        _
      $region20: #{tpu_custom_call.1} parent=11 // pred_fallthru
        _
      // Predicated region
      $region21: #{tpu_custom_call.1} parent=11 // pred_check
        %p212 = pneg %p102
      $region22: #{tpu_custom_call.1} parent=11 // pred_check_branch
        %214 = sbr.rel (%p212) target = $region24
      $region23: #{tpu_custom_call.1} parent=11 // pred_region
        _
      $region24: #{tpu_custom_call.1} parent=11 // pred_fallthru
        _
      // Predicated region
      $region25: #{tpu_custom_call.1} parent=11 // pred_check
        %p215 = pneg %p123
      $region26: #{tpu_custom_call.1} parent=11 // pred_check_branch
        %217 = sbr.rel (%p215) target = $region28
      $region27: #{tpu_custom_call.1} parent=11 // pred_region
        _
      $region28: #{tpu_custom_call.1} parent=11 // pred_fallthru
        _
      // Predicated region
      $region29: #{tpu_custom_call.1} parent=11 // pred_check
        %p218 = pneg %p144
      $region30: #{tpu_custom_call.1} parent=11 // pred_check_branch
        %220 = sbr.rel (%p218) target = $region32
      $region31: #{tpu_custom_call.1} parent=11 // pred_region
        _
      $region32: #{tpu_custom_call.1} parent=11 // pred_fallthru
        _
      // Predicated region
      $region33: #{tpu_custom_call.1} parent=11 // pred_check
        %p221 = pneg %p165
      $region34: #{tpu_custom_call.1} parent=11 // pred_check_branch
        %223 = sbr.rel (%p221) target = $region36
      $region35: #{tpu_custom_call.1} parent=11 // pred_region
        _
      $region36: #{tpu_custom_call.1} parent=11 // pred_fallthru
        _
    $region12: #{tpu_custom_call.1} parent=5 // pred_fallthru
      _
    %p224 = scmp.lt.s32.totalorder %s13, 2
    // Predicated region
    $region37: #{tpu_custom_call.1} parent=5 // pred_check
      %p225 = pneg %p224
    $region38: #{tpu_custom_call.1} parent=5 // pred_check_branch
      %227 = sbr.rel (%p225) target = $region40
    $region39: #{tpu_custom_call.1} parent=5 // pred_region
      // Predicated region
      $region41: #{tpu_custom_call.1} parent=39 // pred_check
        %p228 = pneg %p33
      $region42: #{tpu_custom_call.1} parent=39 // pred_check_branch
        %230 = sbr.rel (%p228) target = $region44
      $region43: #{tpu_custom_call.1} parent=39 // pred_region
        %s231 = smul.u32 19, %s13
        %p232 = scmp.lt.s32.totalorder %s231, 37
        %s233 = scalar_select %p232, %s231, 37
        %s234 = smul.addr %s233, 8
        %s235 = scalar_lea.vmem %s0, %s234
        %s236 = smul.u32 19, %s13
      $region44: #{tpu_custom_call.1} parent=39 // pred_fallthru
        _
    $region40: #{tpu_custom_call.1} parent=5 // pred_fallthru
      _
    %p237 = scmp.le.s32.totalorder 1, %s13
    %p238 = scmp.lt.s32.totalorder %s13, 3
    %p239 = pnand %p237, %p238
    %p240 = pneg %p239
    // Predicated region
    $region45: #{tpu_custom_call.1} parent=5 // pred_check
      _
    $region46: #{tpu_custom_call.1} parent=5 // pred_check_branch
      %242 = sbr.rel (%p239) target = $region48
    $region47: #{tpu_custom_call.1} parent=5 // pred_region
      %s243 = ssub.s32 %s13, 1
      %s244 = smul.u32 19, %s18
      %p245 = scmp.lt.s32.totalorder %s244, 37
      %s246 = scalar_select %p245, %s244, 37
      %s247 = smul.addr %s246, 8
      %s248 = scalar_lea.vmem %s0, %s247
      %p249 = pneg %p39
      %p250 = pneg %p36
      %p251 = pneg %p60
      %p252 = pneg %p57
      %p253 = pneg %p81
      %p254 = pneg %p78
      %p255 = pneg %p102
      %p256 = pneg %p99
      %p257 = pneg %p123
      %p258 = pneg %p120
      %p259 = pneg %p144
      %p260 = pneg %p141
      %p261 = pneg %p165
      %p262 = pneg %p162
      %p263 = pneg %p191
      %p264 = pneg %p188
      %s265 = smul.u32 19, %s18
      %p266 = scmp.lt.s32.totalorder %s265, 37
      %s267 = scalar_select %p266, %s265, 37
      %s268 = smul.addr %s267, 8
      %s269 = scalar_lea.vmem %s7, %s268
      %s270 = smul.u32 19, %s18
      %p271 = scmp.lt.s32.totalorder %s270, 37
      %s272 = scalar_select %p271, %s270, 37
      %s273 = smul.addr %s272, 8
      %s274 = scalar_lea.vmem %s0, %s273
      %s275 = smul.u32 19, %s18
      %s276 = smul.u32 19, %s18
      %p277 = scmp.lt.s32.totalorder %s276, 37
      %s278 = scalar_select %p277, %s276, 37
      %s279 = smul.addr %s278, 8
      %s280 = scalar_lea.vmem %s7, %s279
      %s281 = smul.u32 19, %s18
      %v282 = vld [vmem:[%s274] sm:$0xff]
      %v283 = vld [vmem:[%s274 + $0x8] sm:$0xff]
      %v284 = vld [vmem:[%s274 + $0x10] sm:$0xff]
      %v285 = vld [vmem:[%s274 + $0x18] sm:$0xff]
      %v286 = vld [vmem:[%s274 + $0x20] sm:$0xff]
      %v287 = vld [vmem:[%s274 + $0x28] sm:$0xff]
      %v288 = vld [vmem:[%s274 + $0x30] sm:$0xff]
      %v289 = vld [vmem:[%s274 + $0x38] sm:$0xff]
      %v290 = vld [vmem:[%s274 + $0x40] sm:$0xff]
      %v291 = vld [vmem:[%s274 + $0x48] sm:$0xff]
      %v292 = vld [vmem:[%s274 + $0x50] sm:$0xff]
      %v293 = vld [vmem:[%s274 + $0x58] sm:$0xff]
      %v294 = vld [vmem:[%s274 + $0x60] sm:$0xff]
      %v295 = vld [vmem:[%s274 + $0x68] sm:$0xff]
      %v296 = vld [vmem:[%s274 + $0x70] sm:$0xff]
      %v297 = vld [vmem:[%s274 + $0x78] sm:$0xff]
      %v298 = vld [vmem:[%s274 + $0x80] sm:$0xff]
      %v299 = vld [vmem:[%s274 + $0x88] sm:$0xff]
      %v300 = vld [vmem:[%s274 + $0x90] sm:$0xff]
      %v301 = vld [vmem:[%s1] sm:$0xff]
      %v302 = vld [vmem:[%s1 + $0x8] sm:$0xff]
      %v303 = vld [vmem:[%s2] sm:$0x1]
      %v305 = vlaneseq
      %v306 = vshrl.u32 %v305, 7
      %v307 = vsub.s32 0, %v306
      %v308 = vrot.slane %v303, %v307
      %vm310 = vcmask 130048
      %v312 = vsel %vm310, %v282, 0
      %v315 = vsel %vm310, %v283, 0
      %v318 = vsel %vm310, %v284, 0
      %v321 = vsel %vm310, %v285, 0
      %v324 = vsel %vm310, %v286, 0
      %v327 = vsel %vm310, %v287, 0
      %v330 = vsel %vm310, %v288, 0
      %v333 = vsel %vm310, %v289, 0
      %v336 = vsel %vm310, %v290, 0
      %v339 = vsel %vm310, %v291, 0
      %v342 = vsel %vm310, %v292, 0
      %v345 = vsel %vm310, %v293, 0
      %v348 = vsel %vm310, %v294, 0
      %v351 = vsel %vm310, %v295, 0
      %v354 = vsel %vm310, %v296, 0
      %v357 = vsel %vm310, %v297, 0
      %v360 = vsel %vm310, %v298, 0
      %v363 = vsel %vm310, %v299, 0
      %v366 = vsel %vm310, %v300, 0
      %368 = vmatprep.subr.mxu0 0.0
      %369 = vmatpush1.msra.mxu0 0.0
      %370 = vmatprep.subr.mxu0 0.0
      %371 = vmatpush1.msra.mxu0 0.0
      %372 = vmatprep.subr.mxu0 0.0
      %373 = vmatpush1.msra.mxu0 0.0
      %374 = vmatprep.subr.mxu0 0.0
      %375 = vmatpush1.msra.mxu0 0.0
      %376 = vmatprep.subr.mxu0 0.0
      %377 = vmatpush1.msra.mxu0 0.0
      %378 = vmatprep.subr.mxu0 0.0
      %379 = vmatpush1.msra.mxu0 0.0
      %380 = vmatprep.subr.mxu0 0.0
      %381 = vmatpush1.msra.mxu0 0.0
      %382 = vmatprep.subr.mxu0 0.0
      %383 = vmatpush1.msra.mxu0 0.0
      %384 = vmatprep.subr.mxu0 0.0
      %385 = vmatpush1.msra.mxu0 0.0
      %386 = vmatprep.subr.mxu0 0.0
      %387 = vmatpush1.msra.mxu0 0.0
      %388 = vmatprep.subr.mxu0 0.0
      %389 = vmatpush1.msra.mxu0 0.0
      %390 = vmatprep.subr.mxu0 0.0
      %391 = vmatpush1.msra.mxu0 0.0
      %392 = vmatprep.subr.mxu0 0.0
      %393 = vmatpush1.msra.mxu0 0.0
      %394 = vmatprep.subr.mxu0 0.0
      %395 = vmatpush1.msra.mxu0 0.0
      %396 = vmatprep.subr.mxu0 0.0
      %397 = vmatpush1.msra.mxu0 %v302
      %398 = vmatprep.subr.mxu0 0.0
      %399 = vmatpush1.msra.mxu0 %v301
      %400 = vmatprep.subr.mxu0 0.0
      %401 = vmatpush2.msra.mxu0 0.0
      %402 = vmatprep.subr.mxu0 0.0
      %403 = vmatpush2.msra.mxu0 0.0
      %404 = vmatprep.subr.mxu0 0.0
      %405 = vmatpush2.msra.mxu0 0.0
      %406 = vmatprep.subr.mxu0 0.0
      %407 = vmatpush2.msra.mxu0 0.0
      %408 = vmatprep.subr.mxu0 0.0
      %409 = vmatpush2.msra.mxu0 0.0
      %410 = vmatprep.subr.mxu0 0.0
      %411 = vmatpush2.msra.mxu0 0.0
      %412 = vmatprep.subr.mxu0 0.0
      %413 = vmatpush2.msra.mxu0 0.0
      %414 = vmatprep.subr.mxu0 0.0
      %415 = vmatpush2.msra.mxu0 0.0
      %416 = vmatprep.subr.mxu0 0.0
      %417 = vmatpush2.msra.mxu0 0.0
      %418 = vmatprep.subr.mxu0 0.0
      %419 = vmatpush2.msra.mxu0 0.0
      %420 = vmatprep.subr.mxu0 0.0
      %421 = vmatpush2.msra.mxu0 0.0
      %422 = vmatprep.subr.mxu0 0.0
      %423 = vmatpush2.msra.mxu0 0.0
      %424 = vmatprep.subr.mxu0 0.0
      %425 = vmatpush2.msra.mxu0 0.0
      %426 = vmatprep.subr.mxu0 0.0
      %427 = vmatpush2.msra.mxu0 0.0
      %428 = vmatprep.subr.mxu0 0.0
      %429 = vmatpush2.msra.mxu0 0.0
      %430 = vmatprep.subr.mxu0 0.0
      %431 = vmatpush2.msra.mxu0 0.0
      %432 = vmatprep.mubr.f32.mxu0 0.0
      %433 = vmatmul.mubr.f32.gmra.mxu0 %v312
      %v434 = vpop.f32.mrf.mxu0
      %v435 = vadd.f32 %v308, %v434
      %v436 = vpop.f32.mrf.mxu0
      %437 = vmatprep.mubr.f32.mxu0 0.0
      %438 = vmatmul.mubr.f32.gmra.mxu0 %v315
      %v439 = vpop.f32.mrf.mxu0
      %v440 = vadd.f32 %v308, %v439
      %v441 = vpop.f32.mrf.mxu0
      %442 = vmatprep.mubr.f32.mxu0 0.0
      %443 = vmatmul.mubr.f32.gmra.mxu0 %v318
      %v444 = vpop.f32.mrf.mxu0
      %v445 = vadd.f32 %v308, %v444
      %v446 = vpop.f32.mrf.mxu0
      %447 = vmatprep.mubr.f32.mxu0 0.0
      %448 = vmatmul.mubr.f32.gmra.mxu0 %v321
      %v449 = vpop.f32.mrf.mxu0
      %v450 = vadd.f32 %v308, %v449
      %v451 = vpop.f32.mrf.mxu0
      %452 = vmatprep.mubr.f32.mxu0 0.0
      %453 = vmatmul.mubr.f32.gmra.mxu0 %v324
      %v454 = vpop.f32.mrf.mxu0
      %v455 = vadd.f32 %v308, %v454
      %v456 = vpop.f32.mrf.mxu0
      %457 = vmatprep.mubr.f32.mxu0 0.0
      %458 = vmatmul.mubr.f32.gmra.mxu0 %v327
      %v459 = vpop.f32.mrf.mxu0
      %v460 = vadd.f32 %v308, %v459
      %v461 = vpop.f32.mrf.mxu0
      %462 = vmatprep.mubr.f32.mxu0 0.0
      %463 = vmatmul.mubr.f32.gmra.mxu0 %v330
      %v464 = vpop.f32.mrf.mxu0
      %v465 = vadd.f32 %v308, %v464
      %v466 = vpop.f32.mrf.mxu0
      %467 = vmatprep.mubr.f32.mxu0 0.0
      %468 = vmatmul.mubr.f32.gmra.mxu0 %v333
      %v469 = vpop.f32.mrf.mxu0
      %v470 = vadd.f32 %v308, %v469
      %v471 = vpop.f32.mrf.mxu0
      %472 = vmatprep.mubr.f32.mxu0 0.0
      %473 = vmatmul.mubr.f32.gmra.mxu0 %v336
      %v474 = vpop.f32.mrf.mxu0
      %v475 = vadd.f32 %v308, %v474
      %v476 = vpop.f32.mrf.mxu0
      %477 = vmatprep.mubr.f32.mxu0 0.0
      %478 = vmatmul.mubr.f32.gmra.mxu0 %v339
      %v479 = vpop.f32.mrf.mxu0
      %v480 = vadd.f32 %v308, %v479
      %v481 = vpop.f32.mrf.mxu0
      %482 = vmatprep.mubr.f32.mxu0 0.0
      %483 = vmatmul.mubr.f32.gmra.mxu0 %v342
      %v484 = vpop.f32.mrf.mxu0
      %v485 = vadd.f32 %v308, %v484
      %v486 = vpop.f32.mrf.mxu0
      %487 = vmatprep.mubr.f32.mxu0 0.0
      %488 = vmatmul.mubr.f32.gmra.mxu0 %v345
      %v489 = vpop.f32.mrf.mxu0
      %v490 = vadd.f32 %v308, %v489
      %v491 = vpop.f32.mrf.mxu0
      %492 = vmatprep.mubr.f32.mxu0 0.0
      %493 = vmatmul.mubr.f32.gmra.mxu0 %v348
      %v494 = vpop.f32.mrf.mxu0
      %v495 = vadd.f32 %v308, %v494
      %v496 = vpop.f32.mrf.mxu0
      %497 = vmatprep.mubr.f32.mxu0 0.0
      %498 = vmatmul.mubr.f32.gmra.mxu0 %v351
      %v499 = vpop.f32.mrf.mxu0
      %v500 = vadd.f32 %v308, %v499
      %v501 = vpop.f32.mrf.mxu0
      %502 = vmatprep.mubr.f32.mxu0 0.0
      %503 = vmatmul.mubr.f32.gmra.mxu0 %v354
      %v504 = vpop.f32.mrf.mxu0
      %v505 = vadd.f32 %v308, %v504
      %v506 = vpop.f32.mrf.mxu0
      %507 = vmatprep.mubr.f32.mxu0 0.0
      %508 = vmatmul.mubr.f32.gmra.mxu0 %v357
      %v509 = vpop.f32.mrf.mxu0
      %v510 = vadd.f32 %v308, %v509
      %v511 = vpop.f32.mrf.mxu0
      %512 = vmatprep.mubr.f32.mxu0 0.0
      %513 = vmatmul.mubr.f32.gmra.mxu0 %v360
      %v514 = vpop.f32.mrf.mxu0
      %v515 = vadd.f32 %v308, %v514
      %v516 = vpop.f32.mrf.mxu0
      %517 = vmatprep.mubr.f32.mxu0 0.0
      %518 = vmatmul.mubr.f32.gmra.mxu0 %v363
      %v519 = vpop.f32.mrf.mxu0
      %v520 = vadd.f32 %v308, %v519
      %v521 = vpop.f32.mrf.mxu0
      %522 = vmatprep.mubr.f32.mxu0 0.0
      %523 = vmatmul.mubr.f32.gmra.mxu0 %v366
      %v524 = vpop.f32.mrf.mxu0
      %v525 = vadd.f32 %v308, %v524
      %v526 = vpop.f32.mrf.mxu0
      %527 = vdwg.mxu0
      %v528 = vmax.f32 %v435, 0.0
      %v529 = vmax.f32 %v440, 0.0
      %v530 = vmax.f32 %v445, 0.0
      %v531 = vmax.f32 %v450, 0.0
      %v532 = vmax.f32 %v455, 0.0
      %v533 = vmax.f32 %v460, 0.0
      %v534 = vmax.f32 %v465, 0.0
      %v535 = vmax.f32 %v470, 0.0
      %v536 = vmax.f32 %v475, 0.0
      %v537 = vmax.f32 %v480, 0.0
      %v538 = vmax.f32 %v485, 0.0
      %v539 = vmax.f32 %v490, 0.0
      %v540 = vmax.f32 %v495, 0.0
      %v541 = vmax.f32 %v500, 0.0
      %v542 = vmax.f32 %v505, 0.0
      %v543 = vmax.f32 %v510, 0.0
      %v544 = vmax.f32 %v515, 0.0
      %v545 = vmax.f32 %v520, 0.0
      %v546 = vmax.f32 %v525, 0.0
      %v547 = vld [vmem:[%s3] sm:$0xff]
      %v548 = vld [vmem:[%s3 + $0x8] sm:$0xff]
      %v549 = vld [vmem:[%s3 + $0x10] sm:$0xff]
      %v550 = vld [vmem:[%s3 + $0x18] sm:$0xff]
      %v551 = vld [vmem:[%s3 + $0x20] sm:$0xff]
      %v552 = vld [vmem:[%s3 + $0x28] sm:$0xff]
      %v553 = vld [vmem:[%s3 + $0x30] sm:$0xff]
      %v554 = vld [vmem:[%s3 + $0x38] sm:$0xff]
      %v555 = vld [vmem:[%s3 + $0x40] sm:$0xff]
      %v556 = vld [vmem:[%s3 + $0x48] sm:$0xff]
      %v557 = vld [vmem:[%s3 + $0x50] sm:$0xff]
      %v558 = vld [vmem:[%s3 + $0x58] sm:$0xff]
      %v559 = vld [vmem:[%s3 + $0x60] sm:$0xff]
      %v560 = vld [vmem:[%s3 + $0x68] sm:$0xff]
      %v561 = vld [vmem:[%s3 + $0x70] sm:$0xff]
      %v562 = vld [vmem:[%s3 + $0x78] sm:$0xff]
      %v563 = vld [vmem:[%s4] sm:$0x1]
      %v565 = vlaneseq
      %v566 = vshrl.u32 %v565, 7
      %v567 = vsub.s32 0, %v566
      %v568 = vrot.slane %v563, %v567
      %570 = vmatprep.subr.mxu0 0.0
      %571 = vmatpush1.msra.mxu0 %v562
      %572 = vmatprep.subr.mxu0 0.0
      %573 = vmatpush1.msra.mxu0 %v561
      %574 = vmatprep.subr.mxu0 0.0
      %575 = vmatpush1.msra.mxu0 %v560
      %576 = vmatprep.subr.mxu0 0.0
      %577 = vmatpush1.msra.mxu0 %v559
      %578 = vmatprep.subr.mxu0 0.0
      %579 = vmatpush1.msra.mxu0 %v558
      %580 = vmatprep.subr.mxu0 0.0
      %581 = vmatpush1.msra.mxu0 %v557
      %582 = vmatprep.subr.mxu0 0.0
      %583 = vmatpush1.msra.mxu0 %v556
      %584 = vmatprep.subr.mxu0 0.0
      %585 = vmatpush1.msra.mxu0 %v555
      %586 = vmatprep.subr.mxu0 0.0
      %587 = vmatpush1.msra.mxu0 %v554
      %588 = vmatprep.subr.mxu0 0.0
      %589 = vmatpush1.msra.mxu0 %v553
      %590 = vmatprep.subr.mxu0 0.0
      %591 = vmatpush1.msra.mxu0 %v552
      %592 = vmatprep.subr.mxu0 0.0
      %593 = vmatpush1.msra.mxu0 %v551
      %594 = vmatprep.subr.mxu0 0.0
      %595 = vmatpush1.msra.mxu0 %v550
      %596 = vmatprep.subr.mxu0 0.0
      %597 = vmatpush1.msra.mxu0 %v549
      %598 = vmatprep.subr.mxu0 0.0
      %599 = vmatpush1.msra.mxu0 %v548
      %600 = vmatprep.subr.mxu0 0.0
      %601 = vmatpush1.msra.mxu0 %v547
      %602 = vmatprep.subr.mxu0 0.0
      %603 = vmatpush2.msra.mxu0 0.0
      %604 = vmatprep.subr.mxu0 0.0
      %605 = vmatpush2.msra.mxu0 0.0
      %606 = vmatprep.subr.mxu0 0.0
      %607 = vmatpush2.msra.mxu0 0.0
      %608 = vmatprep.subr.mxu0 0.0
      %609 = vmatpush2.msra.mxu0 0.0
      %610 = vmatprep.subr.mxu0 0.0
      %611 = vmatpush2.msra.mxu0 0.0
      %612 = vmatprep.subr.mxu0 0.0
      %613 = vmatpush2.msra.mxu0 0.0
      %614 = vmatprep.subr.mxu0 0.0
      %615 = vmatpush2.msra.mxu0 0.0
      %616 = vmatprep.subr.mxu0 0.0
      %617 = vmatpush2.msra.mxu0 0.0
      %618 = vmatprep.subr.mxu0 0.0
      %619 = vmatpush2.msra.mxu0 0.0
      %620 = vmatprep.subr.mxu0 0.0
      %621 = vmatpush2.msra.mxu0 0.0
      %622 = vmatprep.subr.mxu0 0.0
      %623 = vmatpush2.msra.mxu0 0.0
      %624 = vmatprep.subr.mxu0 0.0
      %625 = vmatpush2.msra.mxu0 0.0
      %626 = vmatprep.subr.mxu0 0.0
      %627 = vmatpush2.msra.mxu0 0.0
      %628 = vmatprep.subr.mxu0 0.0
      %629 = vmatpush2.msra.mxu0 0.0
      %630 = vmatprep.subr.mxu0 0.0
      %631 = vmatpush2.msra.mxu0 0.0
      %632 = vmatprep.subr.mxu0 0.0
      %633 = vmatpush2.msra.mxu0 0.0
      %634 = vmatprep.mubr.f32.mxu0 0.0
      %635 = vmatmul.mubr.f32.gmra.mxu0 %v528
      %v636 = vpop.f32.mrf.mxu0
      %v637 = vadd.f32 %v568, %v636
      %v638 = vpop.f32.mrf.mxu0
      %639 = vmatprep.mubr.f32.mxu0 0.0
      %640 = vmatmul.mubr.f32.gmra.mxu0 %v529
      %v641 = vpop.f32.mrf.mxu0
      %v642 = vadd.f32 %v568, %v641
      %v643 = vpop.f32.mrf.mxu0
      %644 = vmatprep.mubr.f32.mxu0 0.0
      %645 = vmatmul.mubr.f32.gmra.mxu0 %v530
      %v646 = vpop.f32.mrf.mxu0
      %v647 = vadd.f32 %v568, %v646
      %v648 = vpop.f32.mrf.mxu0
      %649 = vmatprep.mubr.f32.mxu0 0.0
      %650 = vmatmul.mubr.f32.gmra.mxu0 %v531
      %v651 = vpop.f32.mrf.mxu0
      %v652 = vadd.f32 %v568, %v651
      %v653 = vpop.f32.mrf.mxu0
      %654 = vmatprep.mubr.f32.mxu0 0.0
      %655 = vmatmul.mubr.f32.gmra.mxu0 %v532
      %v656 = vpop.f32.mrf.mxu0
      %v657 = vadd.f32 %v568, %v656
      %v658 = vpop.f32.mrf.mxu0
      %659 = vmatprep.mubr.f32.mxu0 0.0
      %660 = vmatmul.mubr.f32.gmra.mxu0 %v533
      %v661 = vpop.f32.mrf.mxu0
      %v662 = vadd.f32 %v568, %v661
      %v663 = vpop.f32.mrf.mxu0
      %664 = vmatprep.mubr.f32.mxu0 0.0
      %665 = vmatmul.mubr.f32.gmra.mxu0 %v534
      %v666 = vpop.f32.mrf.mxu0
      %v667 = vadd.f32 %v568, %v666
      %v668 = vpop.f32.mrf.mxu0
      %669 = vmatprep.mubr.f32.mxu0 0.0
      %670 = vmatmul.mubr.f32.gmra.mxu0 %v535
      %v671 = vpop.f32.mrf.mxu0
      %v672 = vadd.f32 %v568, %v671
      %v673 = vpop.f32.mrf.mxu0
      %674 = vmatprep.mubr.f32.mxu0 0.0
      %675 = vmatmul.mubr.f32.gmra.mxu0 %v536
      %v676 = vpop.f32.mrf.mxu0
      %v677 = vadd.f32 %v568, %v676
      %v678 = vpop.f32.mrf.mxu0
      %679 = vmatprep.mubr.f32.mxu0 0.0
      %680 = vmatmul.mubr.f32.gmra.mxu0 %v537
      %v681 = vpop.f32.mrf.mxu0
      %v682 = vadd.f32 %v568, %v681
      %v683 = vpop.f32.mrf.mxu0
      %684 = vmatprep.mubr.f32.mxu0 0.0
      %685 = vmatmul.mubr.f32.gmra.mxu0 %v538
      %v686 = vpop.f32.mrf.mxu0
      %v687 = vadd.f32 %v568, %v686
      %v688 = vpop.f32.mrf.mxu0
      %689 = vmatprep.mubr.f32.mxu0 0.0
      %690 = vmatmul.mubr.f32.gmra.mxu0 %v539
      %v691 = vpop.f32.mrf.mxu0
      %v692 = vadd.f32 %v568, %v691
      %v693 = vpop.f32.mrf.mxu0
      %694 = vmatprep.mubr.f32.mxu0 0.0
      %695 = vmatmul.mubr.f32.gmra.mxu0 %v540
      %v696 = vpop.f32.mrf.mxu0
      %v697 = vadd.f32 %v568, %v696
      %v698 = vpop.f32.mrf.mxu0
      %699 = vmatprep.mubr.f32.mxu0 0.0
      %700 = vmatmul.mubr.f32.gmra.mxu0 %v541
      %v701 = vpop.f32.mrf.mxu0
      %v702 = vadd.f32 %v568, %v701
      %v703 = vpop.f32.mrf.mxu0
      %704 = vmatprep.mubr.f32.mxu0 0.0
      %705 = vmatmul.mubr.f32.gmra.mxu0 %v542
      %v706 = vpop.f32.mrf.mxu0
      %v707 = vadd.f32 %v568, %v706
      %v708 = vpop.f32.mrf.mxu0
      %709 = vmatprep.mubr.f32.mxu0 0.0
      %710 = vmatmul.mubr.f32.gmra.mxu0 %v543
      %v711 = vpop.f32.mrf.mxu0
      %v712 = vadd.f32 %v568, %v711
      %v713 = vpop.f32.mrf.mxu0
      %714 = vmatprep.mubr.f32.mxu0 0.0
      %715 = vmatmul.mubr.f32.gmra.mxu0 %v544
      %v716 = vpop.f32.mrf.mxu0
      %v717 = vadd.f32 %v568, %v716
      %v718 = vpop.f32.mrf.mxu0
      %719 = vmatprep.mubr.f32.mxu0 0.0
      %720 = vmatmul.mubr.f32.gmra.mxu0 %v545
      %v721 = vpop.f32.mrf.mxu0
      %v722 = vadd.f32 %v568, %v721
      %v723 = vpop.f32.mrf.mxu0
      %724 = vmatprep.mubr.f32.mxu0 0.0
      %725 = vmatmul.mubr.f32.gmra.mxu0 %v546
      %v726 = vpop.f32.mrf.mxu0
      %v727 = vadd.f32 %v568, %v726
      %v728 = vpop.f32.mrf.mxu0
      %729 = vdwg.mxu0
      %v730 = vmax.f32 %v637, 0.0
      %v731 = vmax.f32 %v642, 0.0
      %v732 = vmax.f32 %v647, 0.0
      %v733 = vmax.f32 %v652, 0.0
      %v734 = vmax.f32 %v657, 0.0
      %v735 = vmax.f32 %v662, 0.0
      %v736 = vmax.f32 %v667, 0.0
      %v737 = vmax.f32 %v672, 0.0
      %v738 = vmax.f32 %v677, 0.0
      %v739 = vmax.f32 %v682, 0.0
      %v740 = vmax.f32 %v687, 0.0
      %v741 = vmax.f32 %v692, 0.0
      %v742 = vmax.f32 %v697, 0.0
      %v743 = vmax.f32 %v702, 0.0
      %v744 = vmax.f32 %v707, 0.0
      %v745 = vmax.f32 %v712, 0.0
      %v746 = vmax.f32 %v717, 0.0
      %v747 = vmax.f32 %v722, 0.0
      %v748 = vmax.f32 %v727, 0.0
      %v749 = vld [vmem:[%s5] sm:$0xff]
      %v750 = vld [vmem:[%s5 + $0x8] sm:$0xff]
      %v751 = vld [vmem:[%s5 + $0x10] sm:$0xff]
      %v752 = vld [vmem:[%s5 + $0x18] sm:$0xff]
      %v753 = vld [vmem:[%s5 + $0x20] sm:$0xff]
      %v754 = vld [vmem:[%s5 + $0x28] sm:$0xff]
      %v755 = vld [vmem:[%s5 + $0x30] sm:$0xff]
      %v756 = vld [vmem:[%s5 + $0x38] sm:$0xff]
      %v757 = vld [vmem:[%s5 + $0x40] sm:$0xff]
      %v758 = vld [vmem:[%s5 + $0x48] sm:$0xff]
      %v759 = vld [vmem:[%s5 + $0x50] sm:$0xff]
      %v760 = vld [vmem:[%s5 + $0x58] sm:$0xff]
      %v761 = vld [vmem:[%s5 + $0x60] sm:$0xff]
      %v762 = vld [vmem:[%s5 + $0x68] sm:$0xff]
      %v763 = vld [vmem:[%s5 + $0x70] sm:$0xff]
      %v764 = vld [vmem:[%s5 + $0x78] sm:$0xff]
      %v765 = vld [vmem:[%s6] sm:$0x1]
      %v767 = vlaneseq
      %v768 = vshrl.u32 %v767, 7
      %v769 = vsub.s32 0, %v768
      %v770 = vrot.slane %v765, %v769
      %772 = vmatprep.subr.mxu0 0.0
      %773 = vmatpush1.msra.mxu0 %v764
      %774 = vmatprep.subr.mxu0 0.0
      %775 = vmatpush1.msra.mxu0 %v763
      %776 = vmatprep.subr.mxu0 0.0
      %777 = vmatpush1.msra.mxu0 %v762
      %778 = vmatprep.subr.mxu0 0.0
      %779 = vmatpush1.msra.mxu0 %v761
      %780 = vmatprep.subr.mxu0 0.0
      %781 = vmatpush1.msra.mxu0 %v760
      %782 = vmatprep.subr.mxu0 0.0
      %783 = vmatpush1.msra.mxu0 %v759
      %784 = vmatprep.subr.mxu0 0.0
      %785 = vmatpush1.msra.mxu0 %v758
      %786 = vmatprep.subr.mxu0 0.0
      %787 = vmatpush1.msra.mxu0 %v757
      %788 = vmatprep.subr.mxu0 0.0
      %789 = vmatpush1.msra.mxu0 %v756
      %790 = vmatprep.subr.mxu0 0.0
      %791 = vmatpush1.msra.mxu0 %v755
      %792 = vmatprep.subr.mxu0 0.0
      %793 = vmatpush1.msra.mxu0 %v754
      %794 = vmatprep.subr.mxu0 0.0
      %795 = vmatpush1.msra.mxu0 %v753
      %796 = vmatprep.subr.mxu0 0.0
      %797 = vmatpush1.msra.mxu0 %v752
      %798 = vmatprep.subr.mxu0 0.0
      %799 = vmatpush1.msra.mxu0 %v751
      %800 = vmatprep.subr.mxu0 0.0
      %801 = vmatpush1.msra.mxu0 %v750
      %802 = vmatprep.subr.mxu0 0.0
      %803 = vmatpush1.msra.mxu0 %v749
      %804 = vmatprep.subr.mxu0 0.0
      %805 = vmatpush2.msra.mxu0 0.0
      %806 = vmatprep.subr.mxu0 0.0
      %807 = vmatpush2.msra.mxu0 0.0
      %808 = vmatprep.subr.mxu0 0.0
      %809 = vmatpush2.msra.mxu0 0.0
      %810 = vmatprep.subr.mxu0 0.0
      %811 = vmatpush2.msra.mxu0 0.0
      %812 = vmatprep.subr.mxu0 0.0
      %813 = vmatpush2.msra.mxu0 0.0
      %814 = vmatprep.subr.mxu0 0.0
      %815 = vmatpush2.msra.mxu0 0.0
      %816 = vmatprep.subr.mxu0 0.0
      %817 = vmatpush2.msra.mxu0 0.0
      %818 = vmatprep.subr.mxu0 0.0
      %819 = vmatpush2.msra.mxu0 0.0
      %820 = vmatprep.subr.mxu0 0.0
      %821 = vmatpush2.msra.mxu0 0.0
      %822 = vmatprep.subr.mxu0 0.0
      %823 = vmatpush2.msra.mxu0 0.0
      %824 = vmatprep.subr.mxu0 0.0
      %825 = vmatpush2.msra.mxu0 0.0
      %826 = vmatprep.subr.mxu0 0.0
      %827 = vmatpush2.msra.mxu0 0.0
      %828 = vmatprep.subr.mxu0 0.0
      %829 = vmatpush2.msra.mxu0 0.0
      %830 = vmatprep.subr.mxu0 0.0
      %831 = vmatpush2.msra.mxu0 0.0
      %832 = vmatprep.subr.mxu0 0.0
      %833 = vmatpush2.msra.mxu0 0.0
      %834 = vmatprep.subr.mxu0 0.0
      %835 = vmatpush2.msra.mxu0 0.0
      %836 = vmatprep.mubr.f32.mxu0 0.0
      %837 = vmatmul.mubr.f32.gmra.mxu0 %v730
      %v838 = vpop.f32.mrf.mxu0
      %v839 = vadd.f32 %v770, %v838
      %v840 = vpop.f32.mrf.mxu0
      %841 = vmatprep.mubr.f32.mxu0 0.0
      %842 = vmatmul.mubr.f32.gmra.mxu0 %v731
      %v843 = vpop.f32.mrf.mxu0
      %v844 = vadd.f32 %v770, %v843
      %v845 = vpop.f32.mrf.mxu0
      %846 = vmatprep.mubr.f32.mxu0 0.0
      %847 = vmatmul.mubr.f32.gmra.mxu0 %v732
      %v848 = vpop.f32.mrf.mxu0
      %v849 = vadd.f32 %v770, %v848
      %v850 = vpop.f32.mrf.mxu0
      %851 = vmatprep.mubr.f32.mxu0 0.0
      %852 = vmatmul.mubr.f32.gmra.mxu0 %v733
      %v853 = vpop.f32.mrf.mxu0
      %v854 = vadd.f32 %v770, %v853
      %v855 = vpop.f32.mrf.mxu0
      %856 = vmatprep.mubr.f32.mxu0 0.0
      %857 = vmatmul.mubr.f32.gmra.mxu0 %v734
      %v858 = vpop.f32.mrf.mxu0
      %v859 = vadd.f32 %v770, %v858
      %v860 = vpop.f32.mrf.mxu0
      %861 = vmatprep.mubr.f32.mxu0 0.0
      %862 = vmatmul.mubr.f32.gmra.mxu0 %v735
      %v863 = vpop.f32.mrf.mxu0
      %v864 = vadd.f32 %v770, %v863
      %v865 = vpop.f32.mrf.mxu0
      %866 = vmatprep.mubr.f32.mxu0 0.0
      %867 = vmatmul.mubr.f32.gmra.mxu0 %v736
      %v868 = vpop.f32.mrf.mxu0
      %v869 = vadd.f32 %v770, %v868
      %v870 = vpop.f32.mrf.mxu0
      %871 = vmatprep.mubr.f32.mxu0 0.0
      %872 = vmatmul.mubr.f32.gmra.mxu0 %v737
      %v873 = vpop.f32.mrf.mxu0
      %v874 = vadd.f32 %v770, %v873
      %v875 = vpop.f32.mrf.mxu0
      %876 = vmatprep.mubr.f32.mxu0 0.0
      %877 = vmatmul.mubr.f32.gmra.mxu0 %v738
      %v878 = vpop.f32.mrf.mxu0
      %v879 = vadd.f32 %v770, %v878
      %v880 = vpop.f32.mrf.mxu0
      %881 = vmatprep.mubr.f32.mxu0 0.0
      %882 = vmatmul.mubr.f32.gmra.mxu0 %v739
      %v883 = vpop.f32.mrf.mxu0
      %v884 = vadd.f32 %v770, %v883
      %v885 = vpop.f32.mrf.mxu0
      %886 = vmatprep.mubr.f32.mxu0 0.0
      %887 = vmatmul.mubr.f32.gmra.mxu0 %v740
      %v888 = vpop.f32.mrf.mxu0
      %v889 = vadd.f32 %v770, %v888
      %v890 = vpop.f32.mrf.mxu0
      %891 = vmatprep.mubr.f32.mxu0 0.0
      %892 = vmatmul.mubr.f32.gmra.mxu0 %v741
      %v893 = vpop.f32.mrf.mxu0
      %v894 = vadd.f32 %v770, %v893
      %v895 = vpop.f32.mrf.mxu0
      %896 = vmatprep.mubr.f32.mxu0 0.0
      %897 = vmatmul.mubr.f32.gmra.mxu0 %v742
      %v898 = vpop.f32.mrf.mxu0
      %v899 = vadd.f32 %v770, %v898
      %v900 = vpop.f32.mrf.mxu0
      %901 = vmatprep.mubr.f32.mxu0 0.0
      %902 = vmatmul.mubr.f32.gmra.mxu0 %v743
      %v903 = vpop.f32.mrf.mxu0
      %v904 = vadd.f32 %v770, %v903
      %v905 = vpop.f32.mrf.mxu0
      %906 = vmatprep.mubr.f32.mxu0 0.0
      %907 = vmatmul.mubr.f32.gmra.mxu0 %v744
      %v908 = vpop.f32.mrf.mxu0
      %v909 = vadd.f32 %v770, %v908
      %v910 = vpop.f32.mrf.mxu0
      %911 = vmatprep.mubr.f32.mxu0 0.0
      %912 = vmatmul.mubr.f32.gmra.mxu0 %v745
      %v913 = vpop.f32.mrf.mxu0
      %v914 = vadd.f32 %v770, %v913
      %v915 = vpop.f32.mrf.mxu0
      %916 = vmatprep.mubr.f32.mxu0 0.0
      %917 = vmatmul.mubr.f32.gmra.mxu0 %v746
      %v918 = vpop.f32.mrf.mxu0
      %v919 = vadd.f32 %v770, %v918
      %v920 = vpop.f32.mrf.mxu0
      %921 = vmatprep.mubr.f32.mxu0 0.0
      %922 = vmatmul.mubr.f32.gmra.mxu0 %v747
      %v923 = vpop.f32.mrf.mxu0
      %v924 = vadd.f32 %v770, %v923
      %v925 = vpop.f32.mrf.mxu0
      %926 = vmatprep.mubr.f32.mxu0 0.0
      %927 = vmatmul.mubr.f32.gmra.mxu0 %v748
      %v928 = vpop.f32.mrf.mxu0
      %v929 = vadd.f32 %v770, %v928
      %v930 = vpop.f32.mrf.mxu0
      %931 = vdwg.mxu0
      %vm932 = vcmask 64512
      %933 = vst.msk [vmem:[%s280] sm:$0xff] %vm932, %v839
      %934 = vst.msk [vmem:[%s280 + $0x8] sm:$0xff] %vm932, %v844
      %935 = vst.msk [vmem:[%s280 + $0x10] sm:$0xff] %vm932, %v849
      %936 = vst.msk [vmem:[%s280 + $0x18] sm:$0xff] %vm932, %v854
      %937 = vst.msk [vmem:[%s280 + $0x20] sm:$0xff] %vm932, %v859
      %938 = vst.msk [vmem:[%s280 + $0x28] sm:$0xff] %vm932, %v864
      %939 = vst.msk [vmem:[%s280 + $0x30] sm:$0xff] %vm932, %v869
      %940 = vst.msk [vmem:[%s280 + $0x38] sm:$0xff] %vm932, %v874
      %941 = vst.msk [vmem:[%s280 + $0x40] sm:$0xff] %vm932, %v879
      %942 = vst.msk [vmem:[%s280 + $0x48] sm:$0xff] %vm932, %v884
      %943 = vst.msk [vmem:[%s280 + $0x50] sm:$0xff] %vm932, %v889
      %944 = vst.msk [vmem:[%s280 + $0x58] sm:$0xff] %vm932, %v894
      %945 = vst.msk [vmem:[%s280 + $0x60] sm:$0xff] %vm932, %v899
      %946 = vst.msk [vmem:[%s280 + $0x68] sm:$0xff] %vm932, %v904
      %947 = vst.msk [vmem:[%s280 + $0x70] sm:$0xff] %vm932, %v909
      %948 = vst.msk [vmem:[%s280 + $0x78] sm:$0xff] %vm932, %v914
      %949 = vst.msk [vmem:[%s280 + $0x80] sm:$0xff] %vm932, %v919
      %950 = vst.msk [vmem:[%s280 + $0x88] sm:$0xff] %vm932, %v924
      %951 = vst.msk [vmem:[%s280 + $0x90] sm:$0xff] %vm932, %v929
      %s952 = smul.u32 19, %s18
      %p953 = scmp.lt.s32.totalorder %s952, 37
      %s954 = scalar_select %p953, %s952, 37
      %s955 = smul.addr %s954, 8
      %s956 = scalar_lea.vmem %s7, %s955
      // Predicated region
      $region49: #{tpu_custom_call.1} parent=47 // pred_check
        %p957 = pneg %p188
      $region50: #{tpu_custom_call.1} parent=47 // pred_check_branch
        %959 = sbr.rel (%p957) target = $region52
      $region51: #{tpu_custom_call.1} parent=47 // pred_region
        %s960 = smul.u32 19, %s18
      $region52: #{tpu_custom_call.1} parent=47 // pred_fallthru
        _
    $region48: #{tpu_custom_call.1} parent=5 // pred_fallthru
      _
    %p961 = scmp.le.s32.totalorder 2, %s13
    // Predicated region
    $region53: #{tpu_custom_call.1} parent=5 // pred_check
      %p962 = pneg %p961
    $region54: #{tpu_custom_call.1} parent=5 // pred_check_branch
      %964 = sbr.rel (%p962) target = $region56
    $region55: #{tpu_custom_call.1} parent=5 // pred_region
      %s965 = ssub.s32 %s13, 2
      // Predicated region
      $region57: #{tpu_custom_call.1} parent=55 // pred_check
        %p966 = pneg %p194
      $region58: #{tpu_custom_call.1} parent=55 // pred_check_branch
        %968 = sbr.rel (%p966) target = $region60
      $region59: #{tpu_custom_call.1} parent=55 // pred_region
        %s969 = smul.u32 19, %s19
        %p970 = scmp.lt.s32.totalorder %s969, 37
        %s971 = scalar_select %p970, %s969, 37
        %s972 = smul.addr %s971, 8
        %s973 = scalar_lea.vmem %s7, %s972
      $region60: #{tpu_custom_call.1} parent=55 // pred_fallthru
        _
    $region56: #{tpu_custom_call.1} parent=5 // pred_fallthru
      _
  $region6: #{tpu_custom_call.1} parent=0 // loop_footer
    %s17 = sadd.s32 1, %s13
  $region7: #{tpu_custom_call.1} parent=0 // loop_footer_branch
    %12 = sbr.rel target = $region3
  $region8: #{tpu_custom_call.1} parent=0 // loop_exit
    _

</llo_original>
